<compile_context>
chip_gen: v5e
topology: v5e:2x2
jax: 0.10.0
libtpu: 0.0.40
codegen_flags: <defaults>
</compile_context>

<pallas_src>
import math

import jax
import jax.numpy as jnp
from jax import lax
from jax.experimental import pallas as pl
from jax.experimental.pallas import tpu as pltpu

# ---------------- config (small MistralConfig-consistent values) ----------------
HIDDEN = 32                 # config.hidden_size (base_hidden_size)
CROSS_HIDDEN = 16           # config.cross_attn_hidden_size
INNER = 4 * CROSS_HIDDEN    # CrossAttnMistralBlock.inner_dim = 4 * cross_attn_hidden_size
NUM_HEADS = 4               # config.num_attention_heads
HEAD_DIM = HIDDEN // NUM_HEADS
NUM_KV_HEADS = 2            # config.num_key_value_heads
KV_GROUPS = NUM_HEADS // NUM_KV_HEADS
ROPE_THETA = 10000.0        # config.rope_theta
EPS = 1e-6                  # config.rms_norm_eps (used as LayerNorm eps)
INIT_RANGE = 0.02           # config.initializer_range

B, Q_LEN, KV_LEN = 2, 8, 8
LANES = 128


# --------------------------------- helpers ---------------------------------
def _rotary_tables(seq_len, dim, theta=ROPE_THETA):
    """MistralRotaryEmbedding: cos/sin of shape (seq_len, dim)."""
    inv_freq = 1.0 / (theta ** (jnp.arange(0, dim, 2, dtype=jnp.float32) / dim))
    t = jnp.arange(seq_len, dtype=jnp.float32)
    freqs = jnp.outer(t, inv_freq)
    emb = jnp.concatenate([freqs, freqs], axis=-1)
    return jnp.cos(emb), jnp.sin(emb)


def _rotate_half_matrix(dim):
    """P such that x @ P == rotate_half(x) = concat(-x[dim//2:], x[:dim//2])."""
    half = dim // 2
    p = jnp.zeros((dim, dim), jnp.float32)
    p = p.at[jnp.arange(half) + half, jnp.arange(half)].set(-1.0)   # out[i<half] = -x[i+half]
    p = p.at[jnp.arange(half), jnp.arange(half) + half].set(1.0)    # out[i>=half] = x[i-half]
    return p


# --------------------- one-time parameter folding / packing ---------------------
def prepare_block(params, bsz, q_len, kv_len):
    """Fold + pack weights ONCE (parameter-load time).  Not in the forward path."""
    h = HIDDEN
    nq, nk = bsz * q_len, bsz * kv_len
    p_rot = _rotate_half_matrix(HEAD_DIM)
    scale = 1.0 / math.sqrt(HEAD_DIM)

    def head_lanes(w3):   # (NH, H, d) -> (H, NH*d): heads concatenated along lanes
        return jnp.transpose(w3, (1, 0, 2)).reshape(h, -1)

    # q weights: [plain | rotate_half] along lanes, softmax 1/sqrt(hd) folded in
    wq_t = jnp.transpose(params["wq"].reshape(NUM_HEADS, HEAD_DIM, h), (0, 2, 1))    # (NH,H,HD)
    wq_rot = jnp.einsum("nhd,de->nhe", wq_t, p_rot)
    wq2 = jnp.concatenate([head_lanes(wq_t), head_lanes(wq_rot)], axis=1) * scale    # (H, 2H)

    # k weights: GQA repeat folded in (head n uses kv head n // KV_GROUPS)
    wk_t = jnp.transpose(params["wk"].reshape(NUM_KV_HEADS, HEAD_DIM, h), (0, 2, 1))
    wk_t = jnp.repeat(wk_t, KV_GROUPS, axis=0)                                       # (NH,H,HD)
    wk_rot = jnp.einsum("nhd,de->nhe", wk_t, p_rot)
    wk2 = jnp.concatenate([head_lanes(wk_t), head_lanes(wk_rot)], axis=1)            # (H, 2H)

    # v_proj fused with o_proj per head: heads along lanes -> one 128-lane-wide matmul
    wv_t = jnp.transpose(params["wv"].reshape(NUM_KV_HEADS, HEAD_DIM, h), (0, 2, 1))
    wv_t = jnp.repeat(wv_t, KV_GROUPS, axis=0)                                       # (NH,H,HD)
    wo_t = params["wo"].T.reshape(NUM_HEADS, HEAD_DIM, h)                            # (NH,HD,H)
    wvo2 = head_lanes(jnp.einsum("nhd,ndm->nhm", wv_t, wo_t))                        # (H, NH*H)

    # gate|up fused (lane-dense 2*inner = 128 wide), down transposed
    wgu = jnp.concatenate([params["wg"].T, params["wu"].T], axis=1)                  # (H, 2*INNER)
    wd_t = params["wd"].T                                                            # (INNER, H)

    # single bf16 weight slab (MXU operands)
    wslab = jnp.concatenate([
        jnp.concatenate([wq2, wk2], axis=1),                 # rows 0:H       (H,128)
        wvo2,                                                # rows H:2H      (H,128)
        wgu,                                                 # rows 2H:3H     (H,128)
        jnp.pad(wd_t, ((0, 0), (0, LANES - h))),             # rows 3H:3H+INNER
    ], axis=0).astype(jnp.bfloat16)

    # f32 constant slab: RoPE tables (lane-tiled per head), block-diag mask, LN params
    cos_q, sin_q = _rotary_tables(q_len, HEAD_DIM)
    cos_k, sin_k = _rotary_tables(kv_len, HEAD_DIM)
    qtab = jnp.concatenate([jnp.tile(cos_q, (bsz, NUM_HEADS)),
                            jnp.tile(sin_q, (bsz, NUM_HEADS))], axis=1)              # (nq, 2H)
    ktab = jnp.concatenate([jnp.tile(cos_k, (bsz, NUM_HEADS)),
                            jnp.tile(sin_k, (bsz, NUM_HEADS))], axis=1)              # (nk, 2H)

    rb = jnp.arange(nq)[:, None] // q_len
    cb = jnp.arange(nk)[None, :] // kv_len
    mask = jnp.where(rb == cb, 0.0, -1e30).astype(jnp.float32)                       # (nq, nk)

    norm_tab = jnp.stack([params["ln1_w"], params["ln1_b"],
                          params["ln2_w"], params["ln2_b"]], axis=0)                 # (4, H)

    cslab = jnp.concatenate([
        jnp.pad(qtab, ((0, 0), (0, LANES - 2 * h))),         # rows 0:nq
        jnp.pad(ktab, ((0, 0), (0, LANES - 2 * h))),         # rows nq:nq+nk
        jnp.pad(mask, ((0, 0), (0, LANES - nk))),            # rows nq+nk:2nq+nk
        jnp.pad(norm_tab, ((0, 0), (0, LANES - h))),         # rows 2nq+nk:2nq+nk+4
    ], axis=0).astype(jnp.float32)

    return {"wslab": wslab, "cslab": cslab,
            "bsz": bsz, "q_len": q_len, "kv_len": kv_len}


# -------------------------------- forward ----------------------------------
def cross_attn_mistral_block(hidden_states, encoder_hidden_states, prepared):
    bsz, q_len, hidden = hidden_states.shape
    _, kv_len, _ = encoder_hidden_states.shape
    assert hidden == NUM_HEADS * HEAD_DIM == HIDDEN
    assert (bsz, q_len, kv_len) == (prepared["bsz"], prepared["q_len"], prepared["kv_len"])

    nq, nk = bsz * q_len, bsz * kv_len
    inner = INNER
    hd = HEAD_DIM

    # weight-slab row offsets
    r_wqk, r_wvo, r_wgu, r_wd = 0, hidden, 2 * hidden, 3 * hidden
    # constant-slab row offsets
    r_qtab, r_ktab, r_mask, r_norm = 0, nq, nq + nk, nq + nk + nq

    # activations packed into one slab: [hidden rows ; encoder rows]
    act = jnp.concatenate(
        [hidden_states.astype(jnp.float32).reshape(nq, hidden),
         encoder_hidden_states.astype(jnp.float32).reshape(nk, hidden)], axis=0)

    # --------------------------------- kernel ---------------------------------
    def kernel(act_ref, w_ref, c_ref, out_ref):
        inv_h = 1.0 / hidden

        def layernorm(v, w, b):
            # one fused cross-lane reduce gives sum(x) and sum(x*x) together
            n = v.shape[0]
            stats = jnp.sum(jnp.concatenate([v, v * v], axis=0),
                            axis=-1, keepdims=True) * inv_h            # (2n, 1)
            mu = stats[0:n]
            var = stats[n:2 * n] - mu * mu
            return (v - mu) * lax.rsqrt(var + EPS) * w + b

        x = act_ref[0:nq, :]                                            # (nq, H) f32
        enc = act_ref[nq:nq + nk, :]                                    # (nk, H) f32

        # ---- ln_1 ----
        h1 = layernorm(x, c_ref[r_norm:r_norm + 1, 0:hidden],
                       c_ref[r_norm + 1:r_norm + 2, 0:hidden])
        h1b = h1.astype(jnp.bfloat16)
        encb = enc.astype(jnp.bfloat16)

        # ---- q/k projections: heads along lanes, [plain(32) | rotate_half(32)] ----
        qcat = jnp.dot(h1b, w_ref[r_wqk:r_wqk + hidden, 0:2 * hidden],
                       preferred_element_type=jnp.float32)              # (nq, 2H)
        kcat = jnp.dot(encb, w_ref[r_wqk:r_wqk + hidden, 2 * hidden:4 * hidden],
                       preferred_element_type=jnp.float32)              # (nk, 2H)

        # RoPE = 2 multiplies + 1 add against the lane-tiled [cos|sin] tables
        qtab = c_ref[r_qtab:r_qtab + nq, 0:2 * hidden]
        ktab = c_ref[r_ktab:r_ktab + nk, 0:2 * hidden]
        q = qcat[:, 0:hidden] * qtab[:, 0:hidden] + qcat[:, hidden:] * qtab[:, hidden:]
        k = kcat[:, 0:hidden] * ktab[:, 0:hidden] + kcat[:, hidden:] * ktab[:, hidden:]
        qb = q.astype(jnp.bfloat16)
        kb = k.astype(jnp.bfloat16)

        # ---- fused v@o projection: single 128-lane-dense matmul, heads on lanes ----
        vo = jnp.dot(encb, w_ref[r_wvo:r_wvo + hidden, :],
                     preferred_element_type=jnp.float32)                # (nk, NH*H)

        # ---- per-head scores + softmax (scale folded into wq, mask precomputed) ----
        mask = c_ref[r_mask:r_mask + nq, 0:nk]                          # (nq, nk) additive
        dn = (((1,), (1,)), ((), ()))                                   # contract head_dim
        p_parts, vo_parts = [], []
        for n in range(NUM_HEADS):
            qn = qb[:, n * hd:(n + 1) * hd]
            kn = kb[:, n * hd:(n + 1) * hd]
            s = lax.dot_general(qn, kn, dn, preferred_element_type=jnp.float32) + mask
            s = s - jnp.max(s, axis=-1, keepdims=True)
            e = jnp.exp(s)
            p = e * pl.reciprocal(jnp.sum(e, axis=-1, keepdims=True), approx=True)
            p_parts.append(p)
            vo_parts.append(vo[:, n * hidden:(n + 1) * hidden])

        # ctx matmul + head-sum fused into ONE dot (o_proj already folded into vo):
        # p heads-on-lanes (nq, NH*nk)  @  vo heads-on-rows (NH*nk, H)
        p_all = jnp.concatenate(p_parts, axis=1).astype(jnp.bfloat16)
        vo_all = jnp.concatenate(vo_parts, axis=0).astype(jnp.bfloat16)
        attn_out = jnp.dot(p_all, vo_all, preferred_element_type=jnp.float32)  # (nq, H)

        # ---- residual + ln_2 + SwiGLU MLP + residual ----
        h_res = attn_out + x
        h2 = layernorm(h_res, c_ref[r_norm + 2:r_norm + 3, 0:hidden],
                       c_ref[r_norm + 3:r_norm + 4, 0:hidden])
        gu = jnp.dot(h2.astype(jnp.bfloat16), w_ref[r_wgu:r_wgu + hidden, :],
                     preferred_element_type=jnp.float32)                # (nq, 2*inner)
        g = gu[:, 0:inner]
        u = gu[:, inner:2 * inner]
        ff = jnp.dot((jax.nn.silu(g) * u).astype(jnp.bfloat16),
                     w_ref[r_wd:r_wd + inner, 0:hidden],
                     preferred_element_type=jnp.float32)                # (nq, H)
        out_ref[...] = h_res + ff

    vmem_spec = pl.BlockSpec(memory_space=pltpu.MemorySpace.VMEM)
    out2d = pl.pallas_call(
        kernel,
        out_shape=jax.ShapeDtypeStruct((nq, hidden), jnp.float32),
        in_specs=[vmem_spec, vmem_spec, vmem_spec],
        out_specs=vmem_spec,
    )(act, prepared["wslab"], prepared["cslab"])
    return out2d.reshape(bsz, q_len, hidden)


# ----------------------- pure-JAX reference (for check) ---------------------
def reference(hidden, enc, params):
    def ln(x, w, b):
        mu = x.mean(-1, keepdims=True)
        var = ((x - mu) ** 2).mean(-1, keepdims=True)
        return (x - mu) / jnp.sqrt(var + EPS) * w + b

    def rot_half(x):
        h = x.shape[-1] // 2
        return jnp.concatenate([-x[..., h:], x[..., :h]], axis=-1)

    bsz, q_len, hid = hidden.shape
    kv_len = enc.shape[1]

    h1 = ln(hidden, params["ln1_w"], params["ln1_b"])
    q = (h1 @ params["wq"].T).reshape(bsz, q_len, NUM_HEADS, HEAD_DIM).transpose(0, 2, 1, 3)
    k = (enc @ params["wk"].T).reshape(bsz, kv_len, NUM_KV_HEADS, HEAD_DIM).transpose(0, 2, 1, 3)
    v = (enc @ params["wv"].T).reshape(bsz, kv_len, NUM_KV_HEADS, HEAD_DIM).transpose(0, 2, 1, 3)

    cos_q, sin_q = _rotary_tables(q_len, HEAD_DIM)
    cos_k, sin_k = _rotary_tables(kv_len, HEAD_DIM)
    q = q * cos_q[None, None] + rot_half(q) * sin_q[None, None]
    k = k * cos_k[None, None] + rot_half(k) * sin_k[None, None]

    k = jnp.repeat(k, KV_GROUPS, axis=1)
    v = jnp.repeat(v, KV_GROUPS, axis=1)

    scores = jnp.einsum("bhqd,bhkd->bhqk", q, k) / math.sqrt(HEAD_DIM)
    p = jax.nn.softmax(scores, axis=-1)
    attn = jnp.einsum("bhqk,bhkd->bhqd", p, v)
    attn = attn.transpose(0, 2, 1, 3).reshape(bsz, q_len, hid) @ params["wo"].T

    h = attn + hidden
    h2 = ln(h, params["ln2_w"], params["ln2_b"])
    ff = (jax.nn.silu(h2 @ params["wg"].T) * (h2 @ params["wu"].T)) @ params["wd"].T
    return h + ff


# ---------------------------------- main ------------------------------------
if __name__ == "__main__":
    key = jax.random.PRNGKey(0)
    ks = jax.random.split(key, 10)

    params = {
        "ln1_w": jnp.ones((HIDDEN,), jnp.float32),
        "ln1_b": jnp.zeros((HIDDEN,), jnp.float32),
        "ln2_w": jnp.ones((HIDDEN,), jnp.float32),
        "ln2_b": jnp.zeros((HIDDEN,), jnp.float32),
        "wq": INIT_RANGE * jax.random.normal(ks[0], (NUM_HEADS * HEAD_DIM, HIDDEN), jnp.float32),
        "wk": INIT_RANGE * jax.random.normal(ks[1], (NUM_KV_HEADS * HEAD_DIM, HIDDEN), jnp.float32),
        "wv": INIT_RANGE * jax.random.normal(ks[2], (NUM_KV_HEADS * HEAD_DIM, HIDDEN), jnp.float32),
        "wo": INIT_RANGE * jax.random.normal(ks[3], (HIDDEN, NUM_HEADS * HEAD_DIM), jnp.float32),
        "wg": INIT_RANGE * jax.random.normal(ks[4], (INNER, HIDDEN), jnp.float32),
        "wu": INIT_RANGE * jax.random.normal(ks[5], (INNER, HIDDEN), jnp.float32),
        "wd": INIT_RANGE * jax.random.normal(ks[6], (HIDDEN, INNER), jnp.float32),
    }

    hidden_states = jax.random.normal(ks[7], (B, Q_LEN, HIDDEN), jnp.float32)
    encoder_hidden_states = jax.random.normal(ks[8], (B, KV_LEN, HIDDEN), jnp.float32)

    # one-time weight folding / packing (parameter-load time, cached across calls)
    prepared = prepare_block(params, B, Q_LEN, KV_LEN)
    prepared = jax.tree_util.tree_map(
        lambda a: jax.block_until_ready(a) if isinstance(a, jnp.ndarray) else a, prepared)

    out = cross_attn_mistral_block(hidden_states, encoder_hidden_states, prepared)
    out = jax.block_until_ready(out)

    ref = reference(hidden_states, encoder_hidden_states, params)
    assert out.shape == (B, Q_LEN, HIDDEN)
    # bf16 MXU inputs (f32 accumulation) -> slightly looser tolerance than pure-f32
    assert jnp.allclose(out, ref, atol=2e-3, rtol=2e-3), float(jnp.max(jnp.abs(out - ref)))

    print("KERNEL_OK")
</pallas_src>

<mosaic_0001>
module attributes {stable_mosaic.version = 11 : i64} {
  func.func @kernel(%arg0: memref<32x32xf32, #tpu.memory_space<vmem>>, %arg1: memref<160x128xbf16, #tpu.memory_space<vmem>>, %arg2: memref<52x128xf32, #tpu.memory_space<vmem>>, %arg3: memref<16x32xf32, #tpu.memory_space<vmem>>) attributes {dimension_semantics = [], scalar_prefetch = 0 : i64, scratch_operands = 0 : i64, tpu.core_type = #tpu.core_type<tc>} {
    %c0 = arith.constant 0 : index
    %c0_0 = arith.constant 0 : index
    %0 = vector.load %arg0[%c0, %c0_0] : memref<32x32xf32, #tpu.memory_space<vmem>>, vector<16x32xf32>
    %c16 = arith.constant 16 : index
    %c0_1 = arith.constant 0 : index
    %1 = vector.load %arg0[%c16, %c0_1] : memref<32x32xf32, #tpu.memory_space<vmem>>, vector<16x32xf32>
    %c48 = arith.constant 48 : index
    %c0_2 = arith.constant 0 : index
    %2 = vector.load %arg2[%c48, %c0_2] : memref<52x128xf32, #tpu.memory_space<vmem>>, vector<1x32xf32>
    %c49 = arith.constant 49 : index
    %c0_3 = arith.constant 0 : index
    %3 = vector.load %arg2[%c49, %c0_3] : memref<52x128xf32, #tpu.memory_space<vmem>>, vector<1x32xf32>
    %4 = arith.mulf %0, %0 : vector<16x32xf32>
    %5 = tpu.concatenate %0, %4 in 0 : vector<16x32xf32>, vector<16x32xf32> -> vector<32x32xf32>
    %cst = arith.constant dense<0.000000e+00> : vector<32xf32>
    %6 = vector.multi_reduction <add>, %5, %cst [1] : vector<32x32xf32> to vector<32xf32>
    %7 = vector.shape_cast %6 : vector<32xf32> to vector<32x1xf32>
    %cst_4 = arith.constant 3.125000e-02 : f32
    %8 = vector.broadcast %cst_4 : f32 to vector<32x1xf32>
    %9 = arith.mulf %7, %8 : vector<32x1xf32>
    %10 = vector.extract_strided_slice %9 {offsets = [0, 0], sizes = [16, 1], strides = [1, 1]} : vector<32x1xf32> to vector<16x1xf32>
    %11 = vector.extract_strided_slice %9 {offsets = [16, 0], sizes = [16, 1], strides = [1, 1]} : vector<32x1xf32> to vector<16x1xf32>
    %12 = arith.mulf %10, %10 : vector<16x1xf32>
    %13 = arith.subf %11, %12 : vector<16x1xf32>
    %14 = vector.broadcast %10 : vector<16x1xf32> to vector<16x32xf32>
    %15 = arith.subf %0, %14 : vector<16x32xf32>
    %cst_5 = arith.constant 9.99999997E-7 : f32
    %16 = vector.broadcast %cst_5 : f32 to vector<16x1xf32>
    %17 = arith.addf %13, %16 : vector<16x1xf32>
    %18 = math.rsqrt %17 : vector<16x1xf32>
    %19 = vector.broadcast %18 : vector<16x1xf32> to vector<16x32xf32>
    %20 = arith.mulf %15, %19 : vector<16x32xf32>
    %21 = vector.broadcast %2 : vector<1x32xf32> to vector<16x32xf32>
    %22 = arith.mulf %20, %21 : vector<16x32xf32>
    %23 = vector.broadcast %3 : vector<1x32xf32> to vector<16x32xf32>
    %24 = arith.addf %22, %23 : vector<16x32xf32>
    %25 = arith.truncf %24 : vector<16x32xf32> to vector<16x32xbf16>
    %26 = arith.truncf %1 : vector<16x32xf32> to vector<16x32xbf16>
    %c0_6 = arith.constant 0 : index
    %c0_7 = arith.constant 0 : index
    %27 = vector.load %arg1[%c0_6, %c0_7] : memref<160x128xbf16, #tpu.memory_space<vmem>>, vector<32x64xbf16>
    %cst_8 = arith.constant dense<0.000000e+00> : vector<16x64xf32>
    %28 = tpu.matmul %25, %27, %cst_8 {dimension_numbers = #tpu.dot_dimension_numbers<[1], [0], [0], [1], [0, 0, 1, 1], [], []>} : vector<16x32xbf16>, vector<32x64xbf16>, vector<16x64xf32> -> vector<16x64xf32>
    %c0_9 = arith.constant 0 : index
    %c64 = arith.constant 64 : index
    %29 = vector.load %arg1[%c0_9, %c64] : memref<160x128xbf16, #tpu.memory_space<vmem>>, vector<32x64xbf16>
    %cst_10 = arith.constant dense<0.000000e+00> : vector<16x64xf32>
    %30 = tpu.matmul %26, %29, %cst_10 {dimension_numbers = #tpu.dot_dimension_numbers<[1], [0], [0], [1], [0, 0, 1, 1], [], []>} : vector<16x32xbf16>, vector<32x64xbf16>, vector<16x64xf32> -> vector<16x64xf32>
    %c0_11 = arith.constant 0 : index
    %c0_12 = arith.constant 0 : index
    %31 = vector.load %arg2[%c0_11, %c0_12] : memref<52x128xf32, #tpu.memory_space<vmem>>, vector<16x64xf32>
    %c16_13 = arith.constant 16 : index
    %c0_14 = arith.constant 0 : index
    %32 = vector.load %arg2[%c16_13, %c0_14] : memref<52x128xf32, #tpu.memory_space<vmem>>, vector<16x64xf32>
    %33 = vector.extract_strided_slice %28 {offsets = [0, 0], sizes = [16, 32], strides = [1, 1]} : vector<16x64xf32> to vector<16x32xf32>
    %34 = vector.extract_strided_slice %31 {offsets = [0, 0], sizes = [16, 32], strides = [1, 1]} : vector<16x64xf32> to vector<16x32xf32>
    %35 = arith.mulf %33, %34 : vector<16x32xf32>
    %36 = vector.extract_strided_slice %28 {offsets = [0, 32], sizes = [16, 32], strides = [1, 1]} : vector<16x64xf32> to vector<16x32xf32>
    %37 = vector.extract_strided_slice %31 {offsets = [0, 32], sizes = [16, 32], strides = [1, 1]} : vector<16x64xf32> to vector<16x32xf32>
    %38 = arith.mulf %36, %37 : vector<16x32xf32>
    %39 = arith.addf %35, %38 : vector<16x32xf32>
    %40 = vector.extract_strided_slice %30 {offsets = [0, 0], sizes = [16, 32], strides = [1, 1]} : vector<16x64xf32> to vector<16x32xf32>
    %41 = vector.extract_strided_slice %32 {offsets = [0, 0], sizes = [16, 32], strides = [1, 1]} : vector<16x64xf32> to vector<16x32xf32>
    %42 = arith.mulf %40, %41 : vector<16x32xf32>
    %43 = vector.extract_strided_slice %30 {offsets = [0, 32], sizes = [16, 32], strides = [1, 1]} : vector<16x64xf32> to vector<16x32xf32>
    %44 = vector.extract_strided_slice %32 {offsets = [0, 32], sizes = [16, 32], strides = [1, 1]} : vector<16x64xf32> to vector<16x32xf32>
    %45 = arith.mulf %43, %44 : vector<16x32xf32>
    %46 = arith.addf %42, %45 : vector<16x32xf32>
    %47 = arith.truncf %39 : vector<16x32xf32> to vector<16x32xbf16>
    %48 = arith.truncf %46 : vector<16x32xf32> to vector<16x32xbf16>
    %c32 = arith.constant 32 : index
    %c0_15 = arith.constant 0 : index
    %49 = vector.load %arg1[%c32, %c0_15] : memref<160x128xbf16, #tpu.memory_space<vmem>>, vector<32x128xbf16>
    %cst_16 = arith.constant dense<0.000000e+00> : vector<16x128xf32>
    %50 = tpu.matmul %26, %49, %cst_16 {dimension_numbers = #tpu.dot_dimension_numbers<[1], [0], [0], [1], [0, 0, 1, 1], [], []>} : vector<16x32xbf16>, vector<32x128xbf16>, vector<16x128xf32> -> vector<16x128xf32>
    %c32_17 = arith.constant 32 : index
    %c0_18 = arith.constant 0 : index
    %51 = vector.load %arg2[%c32_17, %c0_18] : memref<52x128xf32, #tpu.memory_space<vmem>>, vector<16x16xf32>
    %52 = vector.extract_strided_slice %47 {offsets = [0, 0], sizes = [16, 8], strides = [1, 1]} : vector<16x32xbf16> to vector<16x8xbf16>
    %53 = vector.extract_strided_slice %48 {offsets = [0, 0], sizes = [16, 8], strides = [1, 1]} : vector<16x32xbf16> to vector<16x8xbf16>
    %cst_19 = arith.constant dense<0.000000e+00> : vector<16x16xf32>
    %54 = tpu.matmul %52, %53, %cst_19 {dimension_numbers = #tpu.dot_dimension_numbers<[1], [1], [0], [0], [0, 0, 1, 0], [], []>} : vector<16x8xbf16>, vector<16x8xbf16>, vector<16x16xf32> -> vector<16x16xf32>
    %55 = arith.addf %54, %51 : vector<16x16xf32>
    %cst_20 = arith.constant dense<0xFF800000> : vector<16xf32>
    %56 = vector.multi_reduction <maximumf>, %55, %cst_20 [1] : vector<16x16xf32> to vector<16xf32>
    %57 = vector.shape_cast %56 : vector<16xf32> to vector<16x1xf32>
    %58 = vector.broadcast %57 : vector<16x1xf32> to vector<16x16xf32>
    %59 = arith.subf %55, %58 : vector<16x16xf32>
    %60 = math.exp %59 : vector<16x16xf32>
    %cst_21 = arith.constant dense<0.000000e+00> : vector<16xf32>
    %61 = vector.multi_reduction <add>, %60, %cst_21 [1] : vector<16x16xf32> to vector<16xf32>
    %62 = vector.shape_cast %61 : vector<16xf32> to vector<16x1xf32>
    %63 = tpu.reciprocal %62 {approx = true} : vector<16x1xf32> -> vector<16x1xf32>
    %64 = vector.broadcast %63 : vector<16x1xf32> to vector<16x16xf32>
    %65 = arith.mulf %60, %64 : vector<16x16xf32>
    %66 = vector.extract_strided_slice %50 {offsets = [0, 0], sizes = [16, 32], strides = [1, 1]} : vector<16x128xf32> to vector<16x32xf32>
    %67 = vector.extract_strided_slice %47 {offsets = [0, 8], sizes = [16, 8], strides = [1, 1]} : vector<16x32xbf16> to vector<16x8xbf16>
    %68 = vector.extract_strided_slice %48 {offsets = [0, 8], sizes = [16, 8], strides = [1, 1]} : vector<16x32xbf16> to vector<16x8xbf16>
    %cst_22 = arith.constant dense<0.000000e+00> : vector<16x16xf32>
    %69 = tpu.matmul %67, %68, %cst_22 {dimension_numbers = #tpu.dot_dimension_numbers<[1], [1], [0], [0], [0, 0, 1, 0], [], []>} : vector<16x8xbf16>, vector<16x8xbf16>, vector<16x16xf32> -> vector<16x16xf32>
    %70 = arith.addf %69, %51 : vector<16x16xf32>
    %cst_23 = arith.constant dense<0xFF800000> : vector<16xf32>
    %71 = vector.multi_reduction <maximumf>, %70, %cst_23 [1] : vector<16x16xf32> to vector<16xf32>
    %72 = vector.shape_cast %71 : vector<16xf32> to vector<16x1xf32>
    %73 = vector.broadcast %72 : vector<16x1xf32> to vector<16x16xf32>
    %74 = arith.subf %70, %73 : vector<16x16xf32>
    %75 = math.exp %74 : vector<16x16xf32>
    %cst_24 = arith.constant dense<0.000000e+00> : vector<16xf32>
    %76 = vector.multi_reduction <add>, %75, %cst_24 [1] : vector<16x16xf32> to vector<16xf32>
    %77 = vector.shape_cast %76 : vector<16xf32> to vector<16x1xf32>
    %78 = tpu.reciprocal %77 {approx = true} : vector<16x1xf32> -> vector<16x1xf32>
    %79 = vector.broadcast %78 : vector<16x1xf32> to vector<16x16xf32>
    %80 = arith.mulf %75, %79 : vector<16x16xf32>
    %81 = vector.extract_strided_slice %50 {offsets = [0, 32], sizes = [16, 32], strides = [1, 1]} : vector<16x128xf32> to vector<16x32xf32>
    %82 = vector.extract_strided_slice %47 {offsets = [0, 16], sizes = [16, 8], strides = [1, 1]} : vector<16x32xbf16> to vector<16x8xbf16>
    %83 = vector.extract_strided_slice %48 {offsets = [0, 16], sizes = [16, 8], strides = [1, 1]} : vector<16x32xbf16> to vector<16x8xbf16>
    %cst_25 = arith.constant dense<0.000000e+00> : vector<16x16xf32>
    %84 = tpu.matmul %82, %83, %cst_25 {dimension_numbers = #tpu.dot_dimension_numbers<[1], [1], [0], [0], [0, 0, 1, 0], [], []>} : vector<16x8xbf16>, vector<16x8xbf16>, vector<16x16xf32> -> vector<16x16xf32>
    %85 = arith.addf %84, %51 : vector<16x16xf32>
    %cst_26 = arith.constant dense<0xFF800000> : vector<16xf32>
    %86 = vector.multi_reduction <maximumf>, %85, %cst_26 [1] : vector<16x16xf32> to vector<16xf32>
    %87 = vector.shape_cast %86 : vector<16xf32> to vector<16x1xf32>
    %88 = vector.broadcast %87 : vector<16x1xf32> to vector<16x16xf32>
    %89 = arith.subf %85, %88 : vector<16x16xf32>
    %90 = math.exp %89 : vector<16x16xf32>
    %cst_27 = arith.constant dense<0.000000e+00> : vector<16xf32>
    %91 = vector.multi_reduction <add>, %90, %cst_27 [1] : vector<16x16xf32> to vector<16xf32>
    %92 = vector.shape_cast %91 : vector<16xf32> to vector<16x1xf32>
    %93 = tpu.reciprocal %92 {approx = true} : vector<16x1xf32> -> vector<16x1xf32>
    %94 = vector.broadcast %93 : vector<16x1xf32> to vector<16x16xf32>
    %95 = arith.mulf %90, %94 : vector<16x16xf32>
    %96 = vector.extract_strided_slice %50 {offsets = [0, 64], sizes = [16, 32], strides = [1, 1]} : vector<16x128xf32> to vector<16x32xf32>
    %97 = vector.extract_strided_slice %47 {offsets = [0, 24], sizes = [16, 8], strides = [1, 1]} : vector<16x32xbf16> to vector<16x8xbf16>
    %98 = vector.extract_strided_slice %48 {offsets = [0, 24], sizes = [16, 8], strides = [1, 1]} : vector<16x32xbf16> to vector<16x8xbf16>
    %cst_28 = arith.constant dense<0.000000e+00> : vector<16x16xf32>
    %99 = tpu.matmul %97, %98, %cst_28 {dimension_numbers = #tpu.dot_dimension_numbers<[1], [1], [0], [0], [0, 0, 1, 0], [], []>} : vector<16x8xbf16>, vector<16x8xbf16>, vector<16x16xf32> -> vector<16x16xf32>
    %100 = arith.addf %99, %51 : vector<16x16xf32>
    %cst_29 = arith.constant dense<0xFF800000> : vector<16xf32>
    %101 = vector.multi_reduction <maximumf>, %100, %cst_29 [1] : vector<16x16xf32> to vector<16xf32>
    %102 = vector.shape_cast %101 : vector<16xf32> to vector<16x1xf32>
    %103 = vector.broadcast %102 : vector<16x1xf32> to vector<16x16xf32>
    %104 = arith.subf %100, %103 : vector<16x16xf32>
    %105 = math.exp %104 : vector<16x16xf32>
    %cst_30 = arith.constant dense<0.000000e+00> : vector<16xf32>
    %106 = vector.multi_reduction <add>, %105, %cst_30 [1] : vector<16x16xf32> to vector<16xf32>
    %107 = vector.shape_cast %106 : vector<16xf32> to vector<16x1xf32>
    %108 = tpu.reciprocal %107 {approx = true} : vector<16x1xf32> -> vector<16x1xf32>
    %109 = vector.broadcast %108 : vector<16x1xf32> to vector<16x16xf32>
    %110 = arith.mulf %105, %109 : vector<16x16xf32>
    %111 = vector.extract_strided_slice %50 {offsets = [0, 96], sizes = [16, 32], strides = [1, 1]} : vector<16x128xf32> to vector<16x32xf32>
    %112 = tpu.concatenate %65, %80, %95, %110 in 1 : vector<16x16xf32>, vector<16x16xf32>, vector<16x16xf32>, vector<16x16xf32> -> vector<16x64xf32>
    %113 = arith.truncf %112 : vector<16x64xf32> to vector<16x64xbf16>
    %114 = tpu.concatenate %66, %81, %96, %111 in 0 : vector<16x32xf32>, vector<16x32xf32>, vector<16x32xf32>, vector<16x32xf32> -> vector<64x32xf32>
    %115 = arith.truncf %114 : vector<64x32xf32> to vector<64x32xbf16>
    %cst_31 = arith.constant dense<0.000000e+00> : vector<16x32xf32>
    %116 = tpu.matmul %113, %115, %cst_31 {dimension_numbers = #tpu.dot_dimension_numbers<[1], [0], [0], [1], [0, 0, 1, 1], [], []>} : vector<16x64xbf16>, vector<64x32xbf16>, vector<16x32xf32> -> vector<16x32xf32>
    %117 = arith.addf %116, %0 : vector<16x32xf32>
    %c50 = arith.constant 50 : index
    %c0_32 = arith.constant 0 : index
    %118 = vector.load %arg2[%c50, %c0_32] : memref<52x128xf32, #tpu.memory_space<vmem>>, vector<1x32xf32>
    %c51 = arith.constant 51 : index
    %c0_33 = arith.constant 0 : index
    %119 = vector.load %arg2[%c51, %c0_33] : memref<52x128xf32, #tpu.memory_space<vmem>>, vector<1x32xf32>
    %120 = arith.mulf %117, %117 : vector<16x32xf32>
    %121 = tpu.concatenate %117, %120 in 0 : vector<16x32xf32>, vector<16x32xf32> -> vector<32x32xf32>
    %cst_34 = arith.constant dense<0.000000e+00> : vector<32xf32>
    %122 = vector.multi_reduction <add>, %121, %cst_34 [1] : vector<32x32xf32> to vector<32xf32>
    %123 = vector.shape_cast %122 : vector<32xf32> to vector<32x1xf32>
    %cst_35 = arith.constant 3.125000e-02 : f32
    %124 = vector.broadcast %cst_35 : f32 to vector<32x1xf32>
    %125 = arith.mulf %123, %124 : vector<32x1xf32>
    %126 = vector.extract_strided_slice %125 {offsets = [0, 0], sizes = [16, 1], strides = [1, 1]} : vector<32x1xf32> to vector<16x1xf32>
    %127 = vector.extract_strided_slice %125 {offsets = [16, 0], sizes = [16, 1], strides = [1, 1]} : vector<32x1xf32> to vector<16x1xf32>
    %128 = arith.mulf %126, %126 : vector<16x1xf32>
    %129 = arith.subf %127, %128 : vector<16x1xf32>
    %130 = vector.broadcast %126 : vector<16x1xf32> to vector<16x32xf32>
    %131 = arith.subf %117, %130 : vector<16x32xf32>
    %cst_36 = arith.constant 9.99999997E-7 : f32
    %132 = vector.broadcast %cst_36 : f32 to vector<16x1xf32>
    %133 = arith.addf %129, %132 : vector<16x1xf32>
    %134 = math.rsqrt %133 : vector<16x1xf32>
    %135 = vector.broadcast %134 : vector<16x1xf32> to vector<16x32xf32>
    %136 = arith.mulf %131, %135 : vector<16x32xf32>
    %137 = vector.broadcast %118 : vector<1x32xf32> to vector<16x32xf32>
    %138 = arith.mulf %136, %137 : vector<16x32xf32>
    %139 = vector.broadcast %119 : vector<1x32xf32> to vector<16x32xf32>
    %140 = arith.addf %138, %139 : vector<16x32xf32>
    %141 = arith.truncf %140 : vector<16x32xf32> to vector<16x32xbf16>
    %c64_37 = arith.constant 64 : index
    %c0_38 = arith.constant 0 : index
    %142 = vector.load %arg1[%c64_37, %c0_38] : memref<160x128xbf16, #tpu.memory_space<vmem>>, vector<32x128xbf16>
    %cst_39 = arith.constant dense<0.000000e+00> : vector<16x128xf32>
    %143 = tpu.matmul %141, %142, %cst_39 {dimension_numbers = #tpu.dot_dimension_numbers<[1], [0], [0], [1], [0, 0, 1, 1], [], []>} : vector<16x32xbf16>, vector<32x128xbf16>, vector<16x128xf32> -> vector<16x128xf32>
    %144 = vector.extract_strided_slice %143 {offsets = [0, 0], sizes = [16, 64], strides = [1, 1]} : vector<16x128xf32> to vector<16x64xf32>
    %145 = vector.extract_strided_slice %143 {offsets = [0, 64], sizes = [16, 64], strides = [1, 1]} : vector<16x128xf32> to vector<16x64xf32>
    %146 = arith.negf %144 : vector<16x64xf32>
    %147 = math.exp %146 : vector<16x64xf32>
    %cst_40 = arith.constant 1.000000e+00 : f32
    %148 = vector.broadcast %cst_40 : f32 to vector<16x64xf32>
    %149 = arith.addf %148, %147 : vector<16x64xf32>
    %150 = arith.divf %148, %149 : vector<16x64xf32>
    %151 = arith.mulf %144, %150 : vector<16x64xf32>
    %152 = arith.mulf %151, %145 : vector<16x64xf32>
    %153 = arith.truncf %152 : vector<16x64xf32> to vector<16x64xbf16>
    %c96 = arith.constant 96 : index
    %c0_41 = arith.constant 0 : index
    %154 = vector.load %arg1[%c96, %c0_41] : memref<160x128xbf16, #tpu.memory_space<vmem>>, vector<64x32xbf16>
    %cst_42 = arith.constant dense<0.000000e+00> : vector<16x32xf32>
    %155 = tpu.matmul %153, %154, %cst_42 {dimension_numbers = #tpu.dot_dimension_numbers<[1], [0], [0], [1], [0, 0, 1, 1], [], []>} : vector<16x64xbf16>, vector<64x32xbf16>, vector<16x32xf32> -> vector<16x32xf32>
    %156 = arith.addf %117, %155 : vector<16x32xf32>
    %c0_43 = arith.constant 0 : index
    %c0_44 = arith.constant 0 : index
    %157 = vector.load %arg3[%c0_43, %c0_44] : memref<16x32xf32, #tpu.memory_space<vmem>>, vector<16x32xf32>
    tpu.vector_store %arg3[%c0_43, %c0_44], %156 {strides = array<i32>} : memref<16x32xf32, #tpu.memory_space<vmem>>, vector<16x32xf32>,
    return
  }
}

</mosaic_0001>

<llo_original>
// kernel: tpu_custom_call.1
$region0: #{tpu_custom_call.1}
  #allocation0 [shape = 'u32[]', space=smem, size = 0x4, offset = 0x4, fixed_abs, tag = 'smem constant byte address 0x4 - core index']
  #allocation1 [shape = 'u32[72,128]{1,0:T(1,128)}', space=vmem, size = 0x9000, scoped, tag = 'internal scratch']
  %s0 = inlined_call_operand.hbm [shape: f32[32,32], index: 0, kind: input, shape index: {}]
  %s1 = inlined_call_operand.hbm [shape: bf16[160,128], index: 1, kind: input, shape index: {}]
  %s2 = inlined_call_operand.hbm [shape: f32[52,128], index: 2, kind: input, shape index: {}]
  %s3 = inlined_call_operand.hbm [shape: f32[16,32], index: 3, kind: output, shape index: {}]
  %s4 = sld [smem:[#allocation0]]
  $region34: #{tpu_custom_call.1} parent=0
    _
  %s6 = ssub.s32 1, %s4
  %s7 = scalar_select 0, %s6, %s4
  $region1: #{tpu_custom_call.1} parent=0
    #allocation2 [shape = 'u8[16384]{0}', space=vmem, size = 0x4000, scoped, tag = 'input window, operand 0, single buffered']
    #allocation3 [shape = 's32[1]{0}', space=sflag, size = 0x4, scoped, tag = 'scoped memory for tpu_custom_call.1']
    #allocation4 [shape = 's32[1]{0}', space=sflag, size = 0x4, scoped, tag = 'scoped memory for tpu_custom_call.1']
    #allocation5 [shape = 'u8[40960]{0}', space=vmem, size = 0xa000, scoped, tag = 'input window, operand 1, single buffered']
    #allocation6 [shape = 's32[1]{0}', space=sflag, size = 0x4, scoped, tag = 'scoped memory for tpu_custom_call.1']
    #allocation7 [shape = 'u8[28672]{0}', space=vmem, size = 0x7000, scoped, tag = 'input window, operand 2, single buffered']
    #allocation8 [shape = 'u8[8192]{0}', space=vmem, size = 0x2000, scoped, tag = 'output window, operand 0, single buffered']
    %8 = vsyncpa [#allocation3], 0
    %9 = vsyncpa [#allocation6], 0
    %10 = vsyncpa [#allocation4], 0
    // Predicated region
    $region2: #{tpu_custom_call.1} parent=1 // pred_check
      _
    $region3: #{tpu_custom_call.1} parent=1 // pred_check_branch
      %12 = sbr.rel (0) target = $region5
    $region4: #{tpu_custom_call.1} parent=1 // pred_region
      %14 = vsyncadd [#allocation3], 0
      %s15 = sshll.u32 %s0, 4
      %s16 = int_to_ptr.hbm [resolvable:$true] %s15
      %s17 = sshll.u32 [#allocation2], 4
      %s18 = int_to_ptr.vmem [resolvable:$true] %s17
      %23 = dma.hbm_to_vmem [thread:$0]  %s16, 512, %s18, [#allocation3], 128, 128, 8
    $region5: #{tpu_custom_call.1} parent=1 // pred_fallthru
      _
    // Predicated region
    $region6: #{tpu_custom_call.1} parent=1 // pred_check
      _
    $region7: #{tpu_custom_call.1} parent=1 // pred_check_branch
      %25 = sbr.rel (0) target = $region9
    $region8: #{tpu_custom_call.1} parent=1 // pred_region
      %27 = vsyncadd [#allocation6], 0
      %s28 = sshll.u32 %s1, 4
      %s29 = int_to_ptr.hbm [resolvable:$true] %s28
      %s30 = sshll.u32 [#allocation5], 4
      %s31 = int_to_ptr.vmem [resolvable:$true] %s30
      %36 = dma.hbm_to_vmem [thread:$0]  %s29, 1280, %s31, [#allocation6], 64, 64, 4
    $region9: #{tpu_custom_call.1} parent=1 // pred_fallthru
      _
    // Predicated region
    $region10: #{tpu_custom_call.1} parent=1 // pred_check
      _
    $region11: #{tpu_custom_call.1} parent=1 // pred_check_branch
      %38 = sbr.rel (0) target = $region13
    $region12: #{tpu_custom_call.1} parent=1 // pred_region
      %40 = vsyncadd [#allocation6], 0
      %s41 = sshll.u32 %s2, 4
      %s42 = int_to_ptr.hbm [resolvable:$true] %s41
      %s43 = sshll.u32 [#allocation7], 4
      %s44 = int_to_ptr.vmem [resolvable:$true] %s43
      %49 = dma.hbm_to_vmem [thread:$0]  %s42, 896, %s44, [#allocation6], 128, 128, 8
    $region13: #{tpu_custom_call.1} parent=1 // pred_fallthru
      _
    // Predicated region
    $region14: #{tpu_custom_call.1} parent=1 // pred_check
      _
    $region15: #{tpu_custom_call.1} parent=1 // pred_check_branch
      %51 = sbr.rel (0) target = $region17
    $region16: #{tpu_custom_call.1} parent=1 // pred_region
      %53 = dma.done [#allocation3], 512
    $region17: #{tpu_custom_call.1} parent=1 // pred_fallthru
      _
    // Predicated region
    $region18: #{tpu_custom_call.1} parent=1 // pred_check
      _
    $region19: #{tpu_custom_call.1} parent=1 // pred_check_branch
      %55 = sbr.rel (0) target = $region21
    $region20: #{tpu_custom_call.1} parent=1 // pred_region
      %57 = dma.done [#allocation6], 1280
    $region21: #{tpu_custom_call.1} parent=1 // pred_fallthru
      _
    // Predicated region
    $region22: #{tpu_custom_call.1} parent=1 // pred_check
      _
    $region23: #{tpu_custom_call.1} parent=1 // pred_check_branch
      %59 = sbr.rel (0) target = $region25
    $region24: #{tpu_custom_call.1} parent=1 // pred_region
      %61 = dma.done [#allocation6], 896
    $region25: #{tpu_custom_call.1} parent=1 // pred_fallthru
      _
    %v63 = vld [vmem:[#allocation2] sm:$0xff]
    %v64 = vld [vmem:[#allocation2 + $0x8] sm:$0xff]
    %v65 = vld [vmem:[#allocation2 + $0x10] sm:$0xff]
    %v66 = vld [vmem:[#allocation2 + $0x18] sm:$0xff]
    %v67 = vld [vmem:[#allocation7 + $0x30] sm:$0x1]
    %v68 = vld [vmem:[#allocation7 + $0x31] sm:$0x1]
    %v69 = vmul.f32 %v63, %v63
    %v70 = vmul.f32 %v64, %v64
    %vm71 = vcmask 261120
    %v72 = vsel %vm71, %v63, 0.0
    %73 = vadd.xlane.f32.xlu0 %v72
    %v74 = vpop.xlane.xlu0 %73
    %v75 = vsel %vm71, %v64, 0.0
    %76 = vadd.xlane.f32.xlu0 %v75
    %v77 = vpop.xlane.xlu0 %76
    %v78 = vsel %vm71, %v69, 0.0
    %79 = vadd.xlane.f32.xlu0 %v78
    %v80 = vpop.xlane.xlu0 %79
    %v81 = vsel %vm71, %v70, 0.0
    %82 = vadd.xlane.f32.xlu0 %v81
    %v83 = vpop.xlane.xlu0 %82
    %v84 = vmul.f32 %v74, 0.03125
    %v85 = vmul.f32 %v77, 0.03125
    %v86 = vmul.f32 %v80, 0.03125
    %v87 = vmul.f32 %v83, 0.03125
    %v88 = vmul.f32 %v84, %v84
    %v89 = vmul.f32 %v85, %v85
    %v90 = vsub.f32 %v86, %v88
    %v91 = vsub.f32 %v87, %v89
    %v92 = vsub.f32 %v63, %v84
    %v93 = vsub.f32 %v64, %v85
    %v94 = vadd.f32 %v90, 1e-06
    %v95 = vadd.f32 %v91, 1e-06
    %v96 = vrsqrt.pop %v94
    %v97 = vmul.f32 %v96, %v94
    %v98 = vmul.f32 %v97, %v96
    %v99 = vmul.f32 0.5, %v98
    %v100 = vsub.f32 1.5, %v99
    %v101 = vmul.f32 %v96, %v100
    %vm102 = vweird.f32 %v94
    %vm103 = vweird.f32 %v96
    %vm104 = vmor %vm102, %vm103
    %v105 = vsel %vm104, %v96, %v101
    %v106 = vrsqrt.pop %v95
    %v107 = vmul.f32 %v106, %v95
    %v108 = vmul.f32 %v107, %v106
    %v109 = vmul.f32 0.5, %v108
    %v110 = vsub.f32 1.5, %v109
    %v111 = vmul.f32 %v106, %v110
    %vm112 = vweird.f32 %v95
    %vm113 = vweird.f32 %v106
    %vm114 = vmor %vm112, %vm113
    %v115 = vsel %vm114, %v106, %v111
    %v116 = vmul.f32 %v92, %v105
    %v117 = vmul.f32 %v93, %v115
    %v118 = vperm.slane %v67, 0
    %v119 = vmul.f32 %v116, %v118
    %v120 = vmul.f32 %v117, %v118
    %v121 = vperm.slane %v68, 0
    %v122 = vadd.f32 %v119, %v121
    %v123 = vadd.f32 %v120, %v121
    %v124 = vpack.c.bf16 %v123, %v122
    %v125 = vpack.c.bf16 %v66, %v65
    %v126 = vld [vmem:[#allocation5] sm:$0xf]
    %v127 = vld [vmem:[#allocation5 + $0x4] sm:$0xf]
    %v128 = vld [vmem:[#allocation5 + $0x8] sm:$0xf]
    %v129 = vld [vmem:[#allocation5 + $0xc] sm:$0xf]
    %v134 = vunpack.c.l.b16 %v126
    %v135 = vunpack.c.l.b16 %v127
    %v136 = vunpack.c.l.b16 %v128
    %v137 = vunpack.c.l.b16 %v129
    %v138 = vpack.c.b16 %v135, %v134
    %v139 = vpack.c.b16 %v137, %v136
    %v143 = vsel %vm71, %v124, 0
    %145 = vmatpush.bf16.msra.mxu0 0
    %146 = vmatpush.bf16.msra.mxu0 0
    %147 = vmatpush.bf16.msra.mxu0 0
    %148 = vmatpush.bf16.msra.mxu0 0
    %149 = vmatpush.bf16.msra.mxu0 0
    %150 = vmatpush.bf16.msra.mxu0 0
    %151 = vmatpush.bf16.msra.mxu0 %v139
    %152 = vmatpush.bf16.msra.mxu0 %v138
    %153 = vmatmul.bf16.gmra.mxu0 %v143
    %v154 = vpop.f32.mrf.mxu0
    %v155 = vadd.f32 0.0, %v154
    %v156 = vpop.f32.mrf.mxu0
    %v157 = vadd.f32 0.0, %v156
    %158 = vdwg.mxu0
    %159 = vrot.lane.b32.xlu0 %v138, 64
    %v160 = vpop.permute.xlu0 %159
    %161 = vrot.lane.b32.xlu0 %v139, 64
    %v162 = vpop.permute.xlu0 %161
    %v166 = vsel %vm71, %v125, 0
    %168 = vmatpush.bf16.msra.mxu0 0
    %169 = vmatpush.bf16.msra.mxu0 0
    %170 = vmatpush.bf16.msra.mxu0 0
    %171 = vmatpush.bf16.msra.mxu0 0
    %172 = vmatpush.bf16.msra.mxu0 0
    %173 = vmatpush.bf16.msra.mxu0 0
    %174 = vmatpush.bf16.msra.mxu0 %v162
    %175 = vmatpush.bf16.msra.mxu0 %v160
    %176 = vmatmul.bf16.gmra.mxu0 %v166
    %v177 = vpop.f32.mrf.mxu0
    %v178 = vadd.f32 0.0, %v177
    %v179 = vpop.f32.mrf.mxu0
    %v180 = vadd.f32 0.0, %v179
    %181 = vdwg.mxu0
    %v182 = vld [vmem:[#allocation7] sm:$0xff]
    %v183 = vld [vmem:[#allocation7 + $0x8] sm:$0xff]
    %v184 = vld [vmem:[#allocation7 + $0x10] sm:$0xff]
    %v185 = vld [vmem:[#allocation7 + $0x18] sm:$0xff]
    %v186 = vmul.f32 %v155, %v182
    %v187 = vmul.f32 %v157, %v183
    %190 = vrot.lane.b32.xlu0 %v186, 96
    %v191 = vpop.permute.xlu0 %190
    %192 = vrot.lane.b32.xlu0 %v187, 96
    %v193 = vpop.permute.xlu0 %192
    %v196 = vadd.f32 %v186, %v191
    %v197 = vadd.f32 %v187, %v193
    %v198 = vmul.f32 %v178, %v184
    %v199 = vmul.f32 %v180, %v185
    %202 = vrot.lane.b32.xlu0 %v198, 96
    %v203 = vpop.permute.xlu0 %202
    %204 = vrot.lane.b32.xlu0 %v199, 96
    %v205 = vpop.permute.xlu0 %204
    %v208 = vadd.f32 %v198, %v203
    %v209 = vadd.f32 %v199, %v205
    %v210 = vpack.c.bf16 %v196, %v196
    %v211 = vpack.c.bf16 %v197, %v197
    %v212 = vpack.c.bf16 %v208, %v208
    %v213 = vpack.c.bf16 %v209, %v209
    %v214 = vld [vmem:[#allocation5 + $0x10] sm:$0xf]
    %v215 = vld [vmem:[#allocation5 + $0x14] sm:$0xf]
    %v216 = vld [vmem:[#allocation5 + $0x18] sm:$0xf]
    %v217 = vld [vmem:[#allocation5 + $0x1c] sm:$0xf]
    %v222 = vunpack.c.l.b16 %v214
    %v223 = vunpack.c.l.b16 %v215
    %v224 = vunpack.c.l.b16 %v216
    %v225 = vunpack.c.l.b16 %v217
    %v226 = vpack.c.b16 %v223, %v222
    %v227 = vpack.c.b16 %v225, %v224
    %230 = vmatpush.bf16.msra.mxu0 0
    %231 = vmatpush.bf16.msra.mxu0 0
    %232 = vmatpush.bf16.msra.mxu0 0
    %233 = vmatpush.bf16.msra.mxu0 0
    %234 = vmatpush.bf16.msra.mxu0 0
    %235 = vmatpush.bf16.msra.mxu0 0
    %236 = vmatpush.bf16.msra.mxu0 %v227
    %237 = vmatpush.bf16.msra.mxu0 %v226
    %238 = vmatmul.bf16.gmra.mxu0 %v166
    %v239 = vpop.f32.mrf.mxu0
    %v240 = vadd.f32 0.0, %v239
    %v241 = vpop.f32.mrf.mxu0
    %v242 = vadd.f32 0.0, %v241
    %243 = vdwg.mxu0
    %v244 = vld [vmem:[#allocation7 + $0x20] sm:$0xff]
    %v245 = vld [vmem:[#allocation7 + $0x28] sm:$0xff]
    %v248 = vunpack.c.l.b16 %v210
    %v249 = vunpack.c.l.b16 %v211
    %v250 = vpack.c.b16 %v249, %v248
    %v253 = vunpack.c.l.b16 %v212
    %v254 = vunpack.c.l.b16 %v213
    %v255 = vpack.c.b16 %v254, %v253
    %vm256 = vcmask 64512
    %v258 = vsel %vm256, %v250, 0
    %v261 = vsel %vm256, %v255, 0
    %263 = vmatpush.bf16.xpose.msra.mxu0 0
    %264 = vmatpush.bf16.xpose.msra.mxu0 0
    %265 = vmatpush.bf16.xpose.msra.mxu0 0
    %266 = vmatpush.bf16.xpose.msra.mxu0 0
    %267 = vmatpush.bf16.xpose.msra.mxu0 0
    %268 = vmatpush.bf16.xpose.msra.mxu0 0
    %269 = vmatpush.bf16.xpose.msra.mxu0 0
    %270 = vmatpush.bf16.xpose.msra.mxu0 %v261
    %271 = vmatmul.bf16.gmra.mxu0 %v258
    %v272 = vpop.f32.mrf.mxu0
    %v273 = vadd.f32 %v244, %v272
    %v274 = vpop.f32.mrf.mxu0
    %v275 = vadd.f32 %v245, %v274
    %276 = vdwg.mxu0
    %vm277 = vcmask 130048
    %v278 = vsel %vm277, %v273, -inf
    %279 = vmax.xlane.f32.xlu0 %v278
    %v280 = vpop.xlane.xlu0 %279
    %v281 = vsel %vm277, %v275, -inf
    %282 = vmax.xlane.f32.xlu0 %v281
    %v283 = vpop.xlane.xlu0 %282
    %v284 = vsub.f32 %v273, %v280
    %v285 = vsub.f32 %v275, %v283
    %v286 = vmul.f32 %v284, 1.442695
    %v287 = vpow.pop %v286
    %v288 = vmul.f32 %v285, 1.442695
    %v289 = vpow.pop %v288
    %v290 = vsel %vm277, %v287, 0.0
    %291 = vadd.xlane.f32.xlu0 %v290
    %v292 = vpop.xlane.xlu0 %291
    %v293 = vsel %vm277, %v289, 0.0
    %294 = vadd.xlane.f32.xlu0 %v293
    %v295 = vpop.xlane.xlu0 %294
    %v296 = vrcp.pop %v292
    %v297 = vrcp.pop %v295
    %v298 = vmul.f32 %v287, %v296
    %v299 = vmul.f32 %v289, %v297
    %300 = vrot.lane.b32.xlu0 %v250, 120
    %v301 = vpop.permute.xlu0 %300
    %302 = vrot.lane.b32.xlu0 %v255, 120
    %v303 = vpop.permute.xlu0 %302
    %v305 = vsel %vm256, %v301, 0
    %v308 = vsel %vm256, %v303, 0
    %310 = vmatpush.bf16.xpose.msra.mxu0 0
    %311 = vmatpush.bf16.xpose.msra.mxu0 0
    %312 = vmatpush.bf16.xpose.msra.mxu0 0
    %313 = vmatpush.bf16.xpose.msra.mxu0 0
    %314 = vmatpush.bf16.xpose.msra.mxu0 0
    %315 = vmatpush.bf16.xpose.msra.mxu0 0
    %316 = vmatpush.bf16.xpose.msra.mxu0 0
    %317 = vmatpush.bf16.xpose.msra.mxu0 %v308
    %318 = vmatmul.bf16.gmra.mxu0 %v305
    %v319 = vpop.f32.mrf.mxu0
    %v320 = vadd.f32 %v244, %v319
    %v321 = vpop.f32.mrf.mxu0
    %v322 = vadd.f32 %v245, %v321
    %323 = vdwg.mxu0
    %v324 = vsel %vm277, %v320, -inf
    %325 = vmax.xlane.f32.xlu0 %v324
    %v326 = vpop.xlane.xlu0 %325
    %v327 = vsel %vm277, %v322, -inf
    %328 = vmax.xlane.f32.xlu0 %v327
    %v329 = vpop.xlane.xlu0 %328
    %v330 = vsub.f32 %v320, %v326
    %v331 = vsub.f32 %v322, %v329
    %v332 = vmul.f32 %v330, 1.442695
    %v333 = vpow.pop %v332
    %v334 = vmul.f32 %v331, 1.442695
    %v335 = vpow.pop %v334
    %v336 = vsel %vm277, %v333, 0.0
    %337 = vadd.xlane.f32.xlu0 %v336
    %v338 = vpop.xlane.xlu0 %337
    %v339 = vsel %vm277, %v335, 0.0
    %340 = vadd.xlane.f32.xlu0 %v339
    %v341 = vpop.xlane.xlu0 %340
    %v342 = vrcp.pop %v338
    %v343 = vrcp.pop %v341
    %v344 = vmul.f32 %v333, %v342
    %v345 = vmul.f32 %v335, %v343
    %346 = vrot.lane.b32.xlu0 %v250, 112
    %v347 = vpop.permute.xlu0 %346
    %348 = vrot.lane.b32.xlu0 %v255, 112
    %v349 = vpop.permute.xlu0 %348
    %v351 = vsel %vm256, %v347, 0
    %v354 = vsel %vm256, %v349, 0
    %356 = vmatpush.bf16.xpose.msra.mxu0 0
    %357 = vmatpush.bf16.xpose.msra.mxu0 0
    %358 = vmatpush.bf16.xpose.msra.mxu0 0
    %359 = vmatpush.bf16.xpose.msra.mxu0 0
    %360 = vmatpush.bf16.xpose.msra.mxu0 0
    %361 = vmatpush.bf16.xpose.msra.mxu0 0
    %362 = vmatpush.bf16.xpose.msra.mxu0 0
    %363 = vmatpush.bf16.xpose.msra.mxu0 %v354
    %364 = vmatmul.bf16.gmra.mxu0 %v351
    %v365 = vpop.f32.mrf.mxu0
    %v366 = vadd.f32 %v244, %v365
    %v367 = vpop.f32.mrf.mxu0
    %v368 = vadd.f32 %v245, %v367
    %369 = vdwg.mxu0
    %v370 = vsel %vm277, %v366, -inf
    %371 = vmax.xlane.f32.xlu0 %v370
    %v372 = vpop.xlane.xlu0 %371
    %v373 = vsel %vm277, %v368, -inf
    %374 = vmax.xlane.f32.xlu0 %v373
    %v375 = vpop.xlane.xlu0 %374
    %v376 = vsub.f32 %v366, %v372
    %v377 = vsub.f32 %v368, %v375
    %v378 = vmul.f32 %v376, 1.442695
    %v379 = vpow.pop %v378
    %v380 = vmul.f32 %v377, 1.442695
    %v381 = vpow.pop %v380
    %v382 = vsel %vm277, %v379, 0.0
    %383 = vadd.xlane.f32.xlu0 %v382
    %v384 = vpop.xlane.xlu0 %383
    %v385 = vsel %vm277, %v381, 0.0
    %386 = vadd.xlane.f32.xlu0 %v385
    %v387 = vpop.xlane.xlu0 %386
    %v388 = vrcp.pop %v384
    %v389 = vrcp.pop %v387
    %v390 = vmul.f32 %v379, %v388
    %v391 = vmul.f32 %v381, %v389
    %392 = vrot.lane.b32.xlu0 %v250, 104
    %v393 = vpop.permute.xlu0 %392
    %394 = vrot.lane.b32.xlu0 %v255, 104
    %v395 = vpop.permute.xlu0 %394
    %v397 = vsel %vm256, %v393, 0
    %v400 = vsel %vm256, %v395, 0
    %402 = vmatpush.bf16.xpose.msra.mxu0 0
    %403 = vmatpush.bf16.xpose.msra.mxu0 0
    %404 = vmatpush.bf16.xpose.msra.mxu0 0
    %405 = vmatpush.bf16.xpose.msra.mxu0 0
    %406 = vmatpush.bf16.xpose.msra.mxu0 0
    %407 = vmatpush.bf16.xpose.msra.mxu0 0
    %408 = vmatpush.bf16.xpose.msra.mxu0 0
    %409 = vmatpush.bf16.xpose.msra.mxu0 %v400
    %410 = vmatmul.bf16.gmra.mxu0 %v397
    %v411 = vpop.f32.mrf.mxu0
    %v412 = vadd.f32 %v244, %v411
    %v413 = vpop.f32.mrf.mxu0
    %v414 = vadd.f32 %v245, %v413
    %415 = vdwg.mxu0
    %v416 = vsel %vm277, %v412, -inf
    %417 = vmax.xlane.f32.xlu0 %v416
    %v418 = vpop.xlane.xlu0 %417
    %v419 = vsel %vm277, %v414, -inf
    %420 = vmax.xlane.f32.xlu0 %v419
    %v421 = vpop.xlane.xlu0 %420
    %v422 = vsub.f32 %v412, %v418
    %v423 = vsub.f32 %v414, %v421
    %v424 = vmul.f32 %v422, 1.442695
    %v425 = vpow.pop %v424
    %v426 = vmul.f32 %v423, 1.442695
    %v427 = vpow.pop %v426
    %v428 = vsel %vm277, %v425, 0.0
    %429 = vadd.xlane.f32.xlu0 %v428
    %v430 = vpop.xlane.xlu0 %429
    %v431 = vsel %vm277, %v427, 0.0
    %432 = vadd.xlane.f32.xlu0 %v431
    %v433 = vpop.xlane.xlu0 %432
    %v434 = vrcp.pop %v430
    %v435 = vrcp.pop %v433
    %v436 = vmul.f32 %v425, %v434
    %v437 = vmul.f32 %v427, %v435
    %440 = vrot.lane.b32.xlu0 %v344, 16
    %v441 = vpop.permute.xlu0 %440
    %442 = vrot.lane.b32.xlu0 %v345, 16
    %v443 = vpop.permute.xlu0 %442
    %448 = vrot.lane.b32.xlu0 %v390, 32
    %v449 = vpop.permute.xlu0 %448
    %450 = vrot.lane.b32.xlu0 %v391, 32
    %v451 = vpop.permute.xlu0 %450
    %456 = vrot.lane.b32.xlu0 %v436, 48
    %v457 = vpop.permute.xlu0 %456
    %458 = vrot.lane.b32.xlu0 %v437, 48
    %v459 = vpop.permute.xlu0 %458
    %v462 = vsel %vm277, %v298, %v441
    %v463 = vsel %vm277, %v299, %v443
    %v464 = vsel %vm71, %v462, %v449
    %v465 = vsel %vm71, %v463, %v451
    %vm466 = vcmask 392192
    %v467 = vsel %vm466, %v464, %v457
    %v468 = vsel %vm466, %v465, %v459
    %v469 = vpack.c.bf16 %v468, %v467
    %472 = vrot.lane.b32.xlu0 %v240, 96
    %v473 = vpop.permute.xlu0 %472
    %474 = vrot.lane.b32.xlu0 %v242, 96
    %v475 = vpop.permute.xlu0 %474
    %478 = vrot.lane.b32.xlu0 %v240, 64
    %v479 = vpop.permute.xlu0 %478
    %480 = vrot.lane.b32.xlu0 %v242, 64
    %v481 = vpop.permute.xlu0 %480
    %484 = vrot.lane.b32.xlu0 %v240, 32
    %v485 = vpop.permute.xlu0 %484
    %486 = vrot.lane.b32.xlu0 %v242, 32
    %v487 = vpop.permute.xlu0 %486
    %v490 = vpack.c.bf16 %v242, %v240
    %v491 = vpack.c.bf16 %v475, %v473
    %v492 = vpack.c.bf16 %v481, %v479
    %v493 = vpack.c.bf16 %v487, %v485
    %vm494 = vcmask 523264
    %v496 = vsel %vm494, %v469, 0
    %498 = vmatpush.bf16.msra.mxu0 0
    %499 = vmatpush.bf16.msra.mxu0 0
    %500 = vmatpush.bf16.msra.mxu0 0
    %501 = vmatpush.bf16.msra.mxu0 0
    %502 = vmatpush.bf16.msra.mxu0 %v493
    %503 = vmatpush.bf16.msra.mxu0 %v492
    %504 = vmatpush.bf16.msra.mxu0 %v491
    %505 = vmatpush.bf16.msra.mxu0 %v490
    %506 = vmatmul.bf16.gmra.mxu0 %v496
    %v507 = vpop.f32.mrf.mxu0
    %v508 = vadd.f32 %v63, %v507
    %v509 = vpop.f32.mrf.mxu0
    %v510 = vadd.f32 %v64, %v509
    %511 = vdwg.mxu0
    %v512 = vld [vmem:[#allocation7 + $0x32] sm:$0x1]
    %v513 = vld [vmem:[#allocation7 + $0x33] sm:$0x1]
    %v514 = vmul.f32 %v508, %v508
    %v515 = vmul.f32 %v510, %v510
    %v516 = vsel %vm71, %v508, 0.0
    %517 = vadd.xlane.f32.xlu0 %v516
    %v518 = vpop.xlane.xlu0 %517
    %v519 = vsel %vm71, %v510, 0.0
    %520 = vadd.xlane.f32.xlu0 %v519
    %v521 = vpop.xlane.xlu0 %520
    %v522 = vsel %vm71, %v514, 0.0
    %523 = vadd.xlane.f32.xlu0 %v522
    %v524 = vpop.xlane.xlu0 %523
    %v525 = vsel %vm71, %v515, 0.0
    %526 = vadd.xlane.f32.xlu0 %v525
    %v527 = vpop.xlane.xlu0 %526
    %v528 = vmul.f32 %v518, 0.03125
    %v529 = vmul.f32 %v521, 0.03125
    %v530 = vmul.f32 %v524, 0.03125
    %v531 = vmul.f32 %v527, 0.03125
    %v532 = vmul.f32 %v528, %v528
    %v533 = vmul.f32 %v529, %v529
    %v534 = vsub.f32 %v530, %v532
    %v535 = vsub.f32 %v531, %v533
    %v536 = vsub.f32 %v508, %v528
    %v537 = vsub.f32 %v510, %v529
    %v538 = vadd.f32 %v534, 1e-06
    %v539 = vadd.f32 %v535, 1e-06
    %v540 = vrsqrt.pop %v538
    %v541 = vmul.f32 %v540, %v538
    %v542 = vmul.f32 %v541, %v540
    %v543 = vmul.f32 0.5, %v542
    %v544 = vsub.f32 1.5, %v543
    %v545 = vmul.f32 %v540, %v544
    %vm546 = vweird.f32 %v538
    %vm547 = vweird.f32 %v540
    %vm548 = vmor %vm546, %vm547
    %v549 = vsel %vm548, %v540, %v545
    %v550 = vrsqrt.pop %v539
    %v551 = vmul.f32 %v550, %v539
    %v552 = vmul.f32 %v551, %v550
    %v553 = vmul.f32 0.5, %v552
    %v554 = vsub.f32 1.5, %v553
    %v555 = vmul.f32 %v550, %v554
    %vm556 = vweird.f32 %v539
    %vm557 = vweird.f32 %v550
    %vm558 = vmor %vm556, %vm557
    %v559 = vsel %vm558, %v550, %v555
    %v560 = vmul.f32 %v536, %v549
    %v561 = vmul.f32 %v537, %v559
    %v562 = vperm.slane %v512, 0
    %v563 = vmul.f32 %v560, %v562
    %v564 = vmul.f32 %v561, %v562
    %v565 = vperm.slane %v513, 0
    %v566 = vadd.f32 %v563, %v565
    %v567 = vadd.f32 %v564, %v565
    %v568 = vpack.c.bf16 %v567, %v566
    %v569 = vld [vmem:[#allocation5 + $0x20] sm:$0xf]
    %v570 = vld [vmem:[#allocation5 + $0x24] sm:$0xf]
    %v571 = vld [vmem:[#allocation5 + $0x28] sm:$0xf]
    %v572 = vld [vmem:[#allocation5 + $0x2c] sm:$0xf]
    %v577 = vunpack.c.l.b16 %v569
    %v578 = vunpack.c.l.b16 %v570
    %v579 = vunpack.c.l.b16 %v571
    %v580 = vunpack.c.l.b16 %v572
    %v581 = vpack.c.b16 %v578, %v577
    %v582 = vpack.c.b16 %v580, %v579
    %v586 = vsel %vm71, %v568, 0
    %588 = vmatpush.bf16.msra.mxu0 0
    %589 = vmatpush.bf16.msra.mxu0 0
    %590 = vmatpush.bf16.msra.mxu0 0
    %591 = vmatpush.bf16.msra.mxu0 0
    %592 = vmatpush.bf16.msra.mxu0 0
    %593 = vmatpush.bf16.msra.mxu0 0
    %594 = vmatpush.bf16.msra.mxu0 %v582
    %595 = vmatpush.bf16.msra.mxu0 %v581
    %596 = vmatmul.bf16.gmra.mxu0 %v586
    %v597 = vpop.f32.mrf.mxu0
    %v598 = vadd.f32 0.0, %v597
    %v599 = vpop.f32.mrf.mxu0
    %v600 = vadd.f32 0.0, %v599
    %601 = vdwg.mxu0
    %v602 = vxor.u32 %v598, 2147483648
    %v603 = vxor.u32 %v600, 2147483648
    %v604 = vmul.f32 %v602, 1.442695
    %v605 = vpow.pop %v604
    %v606 = vmul.f32 %v603, 1.442695
    %v607 = vpow.pop %v606
    %v608 = vadd.f32 %v605, 1.0
    %v609 = vadd.f32 %v607, 1.0
    %v610 = vrcp.pop %v608
    %v611 = vmul.f32 %v608, %v610
    %v612 = vsub.f32 1.0, %v611
    %v613 = vmul.f32 %v610, %v612
    %v614 = vadd.f32 %v610, %v613
    %vm615 = vweird.f32 %v608
    %vm616 = vweird.f32 %v610
    %vm617 = vmor %vm615, %vm616
    %v618 = vsel %vm617, %v610, %v614
    %v619 = vand.u32 2147483647, %v608
    %vm620 = vcmp.eq.f32.partialorder %v619, 8.507059e+37
    %v621 = vand.u32 %v608, 2147483648
    %v622 = vor.u32 1.1754944e-38, %v621
    %v623 = vsel %vm620, %v622, %v618
    %v624 = vmul.f32 1.0, %v623
    %v625 = vrcp.pop %v609
    %v626 = vmul.f32 %v609, %v625
    %v627 = vsub.f32 1.0, %v626
    %v628 = vmul.f32 %v625, %v627
    %v629 = vadd.f32 %v625, %v628
    %vm630 = vweird.f32 %v609
    %vm631 = vweird.f32 %v625
    %vm632 = vmor %vm630, %vm631
    %v633 = vsel %vm632, %v625, %v629
    %v634 = vand.u32 2147483647, %v609
    %vm635 = vcmp.eq.f32.partialorder %v634, 8.507059e+37
    %v636 = vand.u32 %v609, 2147483648
    %v637 = vor.u32 1.1754944e-38, %v636
    %v638 = vsel %vm635, %v637, %v633
    %v639 = vmul.f32 1.0, %v638
    %v640 = vmul.f32 %v598, %v624
    %v641 = vmul.f32 %v600, %v639
    %644 = vrot.lane.b32.xlu0 %v598, 64
    %v645 = vpop.permute.xlu0 %644
    %646 = vrot.lane.b32.xlu0 %v600, 64
    %v647 = vpop.permute.xlu0 %646
    %v650 = vmul.f32 %v640, %v645
    %v651 = vmul.f32 %v641, %v647
    %v652 = vpack.c.bf16 %v651, %v650
    %v653 = vld [vmem:[#allocation5 + $0x30] sm:$0xf]
    %v654 = vld [vmem:[#allocation5 + $0x34] sm:$0xf]
    %v655 = vld [vmem:[#allocation5 + $0x38] sm:$0xf]
    %v656 = vld [vmem:[#allocation5 + $0x3c] sm:$0xf]
    %v657 = vld [vmem:[#allocation5 + $0x40] sm:$0xf]
    %v658 = vld [vmem:[#allocation5 + $0x44] sm:$0xf]
    %v659 = vld [vmem:[#allocation5 + $0x48] sm:$0xf]
    %v660 = vld [vmem:[#allocation5 + $0x4c] sm:$0xf]
    %v669 = vunpack.c.l.b16 %v653
    %v670 = vunpack.c.l.b16 %v654
    %v671 = vunpack.c.l.b16 %v655
    %v672 = vunpack.c.l.b16 %v656
    %v673 = vunpack.c.l.b16 %v657
    %v674 = vunpack.c.l.b16 %v658
    %v675 = vunpack.c.l.b16 %v659
    %v676 = vunpack.c.l.b16 %v660
    %v677 = vpack.c.b16 %v670, %v669
    %v678 = vpack.c.b16 %v672, %v671
    %v679 = vpack.c.b16 %v674, %v673
    %v680 = vpack.c.b16 %v676, %v675
    %v686 = vsel %vm494, %v652, 0
    %688 = vmatpush.bf16.msra.mxu0 0
    %689 = vmatpush.bf16.msra.mxu0 0
    %690 = vmatpush.bf16.msra.mxu0 0
    %691 = vmatpush.bf16.msra.mxu0 0
    %692 = vmatpush.bf16.msra.mxu0 %v680
    %693 = vmatpush.bf16.msra.mxu0 %v679
    %694 = vmatpush.bf16.msra.mxu0 %v678
    %695 = vmatpush.bf16.msra.mxu0 %v677
    %696 = vmatmul.bf16.gmra.mxu0 %v686
    %v697 = vpop.f32.mrf.mxu0
    %v698 = vadd.f32 0.0, %v697
    %v699 = vpop.f32.mrf.mxu0
    %v700 = vadd.f32 0.0, %v699
    %701 = vdwg.mxu0
    %v702 = vadd.f32 %v508, %v698
    %v703 = vadd.f32 %v510, %v700
    %704 = vst.msk [vmem:[#allocation8] sm:$0xff] %vm71, %v702
    %705 = vst.msk [vmem:[#allocation8 + $0x8] sm:$0xff] %vm71, %v703
    // Predicated region
    $region26: #{tpu_custom_call.1} parent=1 // pred_check
      _
    $region27: #{tpu_custom_call.1} parent=1 // pred_check_branch
      %707 = sbr.rel (0) target = $region29
    $region28: #{tpu_custom_call.1} parent=1 // pred_region
      %709 = vsyncadd [#allocation4], 0
      %s710 = sshll.u32 [#allocation8], 4
      %s711 = int_to_ptr.vmem [resolvable:$true] %s710
      %s712 = sshll.u32 %s3, 4
      %s713 = int_to_ptr.hbm [resolvable:$true] %s712
      %718 = dma.vmem_to_hbm [thread:$0]  %s711, 256, %s713, [#allocation4], 128, 128, 8
    $region29: #{tpu_custom_call.1} parent=1 // pred_fallthru
      _
    // Predicated region
    $region30: #{tpu_custom_call.1} parent=1 // pred_check
      _
    $region31: #{tpu_custom_call.1} parent=1 // pred_check_branch
      %720 = sbr.rel (0) target = $region33
    $region32: #{tpu_custom_call.1} parent=1 // pred_region
      %722 = dma.done [#allocation4], 256
    $region33: #{tpu_custom_call.1} parent=1 // pred_fallthru
      _
    %723 = vsyncpa [#allocation3], 1
    %724 = vsyncpa [#allocation6], 1
    %725 = vsyncpa [#allocation4], 1

</llo_original>
